<compile_context>
chip_gen: v6e
topology: v6e:2x2x1
jax: 0.10.0
libtpu: 0.0.40
codegen_flags: <defaults>
</compile_context>

<pallas_src>
import jax
import jax.numpy as jnp
from jax.experimental import pallas as pl
from jax.experimental.pallas import tpu as pltpu


_TARGET_TILE_BYTES = 4 * 1024 * 1024    # ~4 MiB tiles: ~16 MiB double-buffered I/O
_CONST_BUDGET_BYTES = 2 * 1024 * 1024   # cap for branch C's precomputed matrices
_VMEM_LIMIT_BYTES = 48 * 1024 * 1024    # I/O buffers + in-kernel f32 temporaries
                                        # (fits v5e/v6e 128 MiB and v7x 64 MiB)


# --------------------------------------------------------------------------- #
# Kernels
# --------------------------------------------------------------------------- #
def _row_mean_kernel(x_ref, o_ref):
    """Mean over the last axis, broadcast-multiply back.

    Used for 2-D (rows, W) blocks (branch A, W % 128 == 0: fully lane-dense)
    and for 3-D (tb, th, W) blocks (branch D catch-all).
    """
    xf = x_ref[...].astype(jnp.float32)            # cast hoisted, reused below
    fw = jnp.mean(xf, axis=-1, keepdims=True)
    o_ref[...] = (fw * xf).astype(o_ref.dtype)


def _blockdiag_mean_kernel(a_ref, x_ref, o_ref):
    """Branch B: x_ref is a (TR, 128) lane-dense tile; a_ref is a 128x128
    block-diagonal averaging matrix (WxW blocks filled with 1/W, valid because
    W divides 128).  One MXU matmul yields every W-segment's mean already
    broadcast to each lane of its segment."""
    xf = x_ref[...].astype(jnp.float32)
    fw = jnp.dot(xf, a_ref[...], preferred_element_type=jnp.float32)
    o_ref[...] = (fw * xf).astype(o_ref.dtype)


def _segmented_mean_kernel(r_ref, b_ref, x_ref, o_ref):
    """Branch C: x_ref is a (TB, H*W) lane-dense tile.  r_ref (H*W, H) holds
    1/W where lane j belongs to row j//W; b_ref (H, H*W) is the 0/1 broadcast
    matrix.  Two skinny MXU matmuls: reduce to per-row means, broadcast back."""
    xf = x_ref[...].astype(jnp.float32)
    means = jnp.dot(xf, r_ref[...], preferred_element_type=jnp.float32)   # (TB, H)
    fw = jnp.dot(means, b_ref[...], preferred_element_type=jnp.float32)   # (TB, H*W)
    o_ref[...] = (fw * xf).astype(o_ref.dtype)


# --------------------------------------------------------------------------- #
# Tiling helpers
# --------------------------------------------------------------------------- #
def _pick_block_rows(n_rows, row_bytes, target_bytes):
    """Rows per block for a 2-D (rows, row_len) view.

    The row count is the block's second-minor dim, so it must be a multiple of
    8 or the full extent.  Sized by an explicit byte budget; callers of the
    lane-dense paths guarantee min(8, n_rows) * row_bytes <= target_bytes, so
    the multiple-of-8 rounding can never blow up VMEM.
    """
    tr = max(1, target_bytes // max(row_bytes, 1))
    if tr >= n_rows:
        # Whole extent fits one block: prefer >=2 grid steps (v7x has two
        # TensorCores) when we can split into multiple-of-8 tiles.
        if n_rows >= 16:
            half = -(-((n_rows + 1) // 2) // 8) * 8
            return min(half, n_rows)
        return n_rows
    tr = (tr // 8) * 8
    if tr == 0:
        tr = min(8, n_rows)
    return tr


def _cost(planes, hw, itemsize):
    # Advisory: memory-bound op (one read + one write per element).
    return pl.CostEstimate(
        flops=2 * planes * hw,
        transcendentals=0,
        bytes_accessed=2 * planes * hw * itemsize,
    )


def _cparams(n_grid_dims):
    return pltpu.CompilerParams(
        dimension_semantics=("parallel",) * n_grid_dims,
        vmem_limit_bytes=_VMEM_LIMIT_BYTES,
    )


# --------------------------------------------------------------------------- #
# Public entry point
# --------------------------------------------------------------------------- #
def frequency_attention(x, *, target_tile_bytes=_TARGET_TILE_BYTES,
                        const_budget_bytes=_CONST_BUDGET_BYTES):
    """x: (N, C, H, W) -> (N, C, H, W); matches FrequencyAttentionModul.forward."""
    n, c, h, w = x.shape
    planes = n * c
    hw = h * w
    itemsize = x.dtype.itemsize
    if planes == 0 or hw == 0:
        return x

    cost = _cost(planes, hw, itemsize)

    # --- Branch A: W itself is lane-dense (multiple of 128) ---------------- #
    if w % 128 == 0:
        rows = planes * h
        x2 = x.reshape(rows, w)                       # free row-major view
        tr = _pick_block_rows(rows, w * itemsize, target_tile_bytes)
        out2 = pl.pallas_call(
            _row_mean_kernel,
            out_shape=jax.ShapeDtypeStruct((rows, w), x.dtype),
            grid_spec=pltpu.PrefetchScalarGridSpec(
                num_scalar_prefetch=0,
                grid=(pl.cdiv(rows, tr),),
                in_specs=[pl.BlockSpec((tr, w), lambda i: (i, 0))],
                out_specs=pl.BlockSpec((tr, w), lambda i: (i, 0)),
            ),
            compiler_params=_cparams(1),
            cost_estimate=cost,
        )(x2)
        return out2.reshape(n, c, h, w)

    # --- Branch B: W divides 128 -> one MXU matmul vs. block-diag matrix --- #
    if 128 % w == 0 and (planes * hw) % 128 == 0:
        rows = planes * hw // 128
        x2 = x.reshape(rows, 128)                     # W-rows never straddle a
                                                      # 128-lane chunk (W | 128)
        idx = jnp.arange(128, dtype=jnp.int32)
        a_mat = ((idx[:, None] // w) == (idx[None, :] // w)).astype(jnp.float32)
        a_mat = a_mat * jnp.float32(1.0 / w)          # 128x128 block-diag of 1/W
        tr = _pick_block_rows(rows, 128 * itemsize, target_tile_bytes)
        out2 = pl.pallas_call(
            _blockdiag_mean_kernel,
            out_shape=jax.ShapeDtypeStruct((rows, 128), x.dtype),
            grid_spec=pltpu.PrefetchScalarGridSpec(
                num_scalar_prefetch=0,
                grid=(pl.cdiv(rows, tr),),
                in_specs=[pl.BlockSpec((128, 128), lambda i: (0, 0)),  # resident
                          pl.BlockSpec((tr, 128), lambda i: (i, 0))],
                out_specs=pl.BlockSpec((tr, 128), lambda i: (i, 0)),
            ),
            compiler_params=_cparams(1),
            cost_estimate=cost,
        )(a_mat, x2)
        return out2.reshape(n, c, h, w)

    # --- Branch C: general W, lane-dense (planes, H*W) blocks + two skinny
    #     MXU matmuls (reduce to per-row means, broadcast back) ------------- #
    min_tb = planes if planes < 8 else 8
    if (min_tb * hw * itemsize <= target_tile_bytes
            and 2 * h * hw * 4 <= const_budget_bytes):
        x2 = x.reshape(planes, hw)
        row_id = jnp.arange(hw, dtype=jnp.int32) // w                  # (H*W,)
        h_id = jnp.arange(h, dtype=jnp.int32)
        r_mat = (row_id[:, None] == h_id[None, :]).astype(jnp.float32)
        r_mat = r_mat * jnp.float32(1.0 / w)                           # (H*W, H)
        b_mat = (h_id[:, None] == row_id[None, :]).astype(jnp.float32)  # (H, H*W)
        tb = _pick_block_rows(planes, hw * itemsize, target_tile_bytes)
        out2 = pl.pallas_call(
            _segmented_mean_kernel,
            out_shape=jax.ShapeDtypeStruct((planes, hw), x.dtype),
            grid_spec=pltpu.PrefetchScalarGridSpec(
                num_scalar_prefetch=0,
                grid=(pl.cdiv(planes, tb),),
                in_specs=[pl.BlockSpec((hw, h), lambda i: (0, 0)),     # resident
                          pl.BlockSpec((h, hw), lambda i: (0, 0)),     # resident
                          pl.BlockSpec((tb, hw), lambda i: (i, 0))],
                out_specs=pl.BlockSpec((tb, hw), lambda i: (i, 0)),
            ),
            compiler_params=_cparams(1),
            cost_estimate=cost,
        )(r_mat, b_mat, x2)
        return out2.reshape(n, c, h, w)

    # --- Branch D: robust catch-all (awkward W with large H*W planes) ------ #
    # (tb, th, W) blocks: lane-sparse for small W, but tiles both the plane
    # and the H axis, so a single huge plane can no longer exceed VMEM.
    x3 = x.reshape(planes, h, w)
    plane_bytes = hw * itemsize
    if plane_bytes <= target_tile_bytes:
        th = h
        tb = max(1, target_tile_bytes // max(plane_bytes, 1))
        if tb >= planes and planes >= 2:
            tb = pl.cdiv(planes, 2)        # >=2 grid steps for v7x TC sharding
        tb = min(tb, planes)
    else:
        tb = 1
        row_bytes = w * itemsize
        th = max(8, (target_tile_bytes // max(row_bytes, 1) // 8) * 8)
        th = min(th, h)                    # full extent allowed when th >= h
        # TODO(synk): a single 8-row strip of a pathologically wide W could
        # still exceed the budget; such shapes would need lane-axis tiling.
    out3 = pl.pallas_call(
        _row_mean_kernel,
        out_shape=jax.ShapeDtypeStruct((planes, h, w), x.dtype),
        grid_spec=pltpu.PrefetchScalarGridSpec(
            num_scalar_prefetch=0,
            grid=(pl.cdiv(planes, tb), pl.cdiv(h, th)),
            in_specs=[pl.BlockSpec((tb, th, w), lambda i, j: (i, j, 0))],
            out_specs=pl.BlockSpec((tb, th, w), lambda i, j: (i, j, 0)),
        ),
        compiler_params=_cparams(2),
        cost_estimate=cost,
    )(x3)
    return out3.reshape(n, c, h, w)


def frequency_attention_ref(x):
    """Pure-JAX reference of the PyTorch forward."""
    fw = jnp.mean(x, axis=-1, keepdims=True)
    return fw * x


if __name__ == "__main__":
    tol = dict(atol=1e-3, rtol=1e-3)

    # Branch B: W=16 divides 128 (NCHW as in the PyTorch module).
    x_b = jax.random.normal(jax.random.PRNGKey(0), (2, 4, 16, 16), dtype=jnp.float32)
    out_b = jax.block_until_ready(frequency_attention(x_b))
    assert out_b.shape == x_b.shape
    assert jnp.allclose(out_b, frequency_attention_ref(x_b), **tol), "branch B mismatch"

    # Branch A: W is a multiple of 128 (plain lane-dense row mean).
    x_a = jax.random.normal(jax.random.PRNGKey(1), (2, 4, 8, 128), dtype=jnp.float32)
    out_a = jax.block_until_ready(frequency_attention(x_a))
    assert jnp.allclose(out_a, frequency_attention_ref(x_a), **tol), "branch A mismatch"

    # Branch C: awkward W (neither divides nor is a multiple of 128).
    x_c = jax.random.normal(jax.random.PRNGKey(2), (2, 4, 16, 20), dtype=jnp.float32)
    out_c = jax.block_until_ready(frequency_attention(x_c))
    assert jnp.allclose(out_c, frequency_attention_ref(x_c), **tol), "branch C mismatch"

    # Branch D: force the catch-all path on the same awkward-W input.
    out_d = jax.block_until_ready(frequency_attention(x_c, const_budget_bytes=0))
    assert jnp.allclose(out_d, frequency_attention_ref(x_c), **tol), "branch D mismatch"

    print("KERNEL_OK")
</pallas_src>

<mosaic_0001>
module attributes {stable_mosaic.version = 11 : i64} {
  func.func @_blockdiag_mean_kernel(%arg0: i32, %arg1: memref<128x128xf32, #tpu.memory_space<vmem>>, %arg2: memref<8x128xf32, #tpu.memory_space<vmem>>, %arg3: memref<8x128xf32, #tpu.memory_space<vmem>>) attributes {dimension_semantics = [#tpu.dimension_semantics<parallel>], iteration_bounds = array<i64: 2>, scalar_prefetch = 0 : i64, scratch_operands = 0 : i64, tpu.core_type = #tpu.core_type<tc>, window_params = [{pipeline_mode = #tpu.pipeline_mode<synchronous>, transform_indices = @transform_0, window_bounds = array<i64: 128, 128>}, {transform_indices = @transform_1, window_bounds = array<i64: 8, 128>}, {transform_indices = @transform_2, window_bounds = array<i64: 8, 128>}]} {
    %c0 = arith.constant 0 : index
    %c0_0 = arith.constant 0 : index
    %0 = vector.load %arg2[%c0, %c0_0] : memref<8x128xf32, #tpu.memory_space<vmem>>, vector<8x128xf32>
    %c0_1 = arith.constant 0 : index
    %c0_2 = arith.constant 0 : index
    %1 = vector.load %arg1[%c0_1, %c0_2] : memref<128x128xf32, #tpu.memory_space<vmem>>, vector<128x128xf32>
    %cst = arith.constant dense<0.000000e+00> : vector<8x128xf32>
    %2 = tpu.matmul %0, %1, %cst {dimension_numbers = #tpu.dot_dimension_numbers<[1], [0], [0], [1], [0, 0, 1, 1], [], []>} : vector<8x128xf32>, vector<128x128xf32>, vector<8x128xf32> -> vector<8x128xf32>
    %3 = arith.mulf %2, %0 : vector<8x128xf32>
    %c0_3 = arith.constant 0 : index
    %c0_4 = arith.constant 0 : index
    %4 = vector.load %arg3[%c0_3, %c0_4] : memref<8x128xf32, #tpu.memory_space<vmem>>, vector<8x128xf32>
    tpu.vector_store %arg3[%c0_3, %c0_4], %3 {strides = array<i32>} : memref<8x128xf32, #tpu.memory_space<vmem>>, vector<8x128xf32>,
    return
  }
  func.func @transform_0(%arg0: i32) -> (i32, i32) {
    %c0_i32 = arith.constant 0 : i32
    %c0_i32_0 = arith.constant 0 : i32
    %c0_i32_1 = arith.constant 0 : i32
    return %c0_i32, %c0_i32_0 : i32, i32
  }
  func.func @transform_1(%arg0: i32) -> (i32, i32) {
    %c0_i32 = arith.constant 0 : i32
    %c0_i32_0 = arith.constant 0 : i32
    return %arg0, %c0_i32 : i32, i32
  }
  func.func @transform_2(%arg0: i32) -> (i32, i32) {
    %c0_i32 = arith.constant 0 : i32
    %c0_i32_0 = arith.constant 0 : i32
    return %arg0, %c0_i32 : i32, i32
  }
}

</mosaic_0001>

<llo_original>
// kernel: tpu_custom_call.1
$region0: #{tpu_custom_call.1}
  #allocation0 [shape = 'u32[]', space=smem, size = 0x4, offset = 0x4, fixed_abs, tag = 'smem constant byte address 0x4 - core index']
  #allocation1 [shape = 'u32[144,128]{1,0:T(1,128)}', space=vmem, size = 0x12000, scoped, tag = 'internal scratch']
  %s0 = inlined_call_operand.hbm [shape: f32[128,128], index: 0, kind: input, shape index: {}]
  %s1 = inlined_call_operand.hbm [shape: f32[16,128], index: 1, kind: input, shape index: {}]
  %s2 = inlined_call_operand.hbm [shape: f32[16,128], index: 2, kind: output, shape index: {}]
  %s3 = sld [smem:[#allocation0]]
  $region49: #{tpu_custom_call.1} parent=0
    _
  %s5 = ssub.s32 1, %s3
  %s6 = scalar_select 0, %s5, %s3
  $region1: #{tpu_custom_call.1} parent=0
    #allocation2 [shape = 'u8[65536]{0}', space=vmem, size = 0x10000, scoped, tag = 'input window, operand 0, single buffered']
    #allocation3 [shape = 's32[2]{0}', space=sflag, size = 0x8, scoped, tag = 'scoped memory for tpu_custom_call.1']
    #allocation4 [shape = 's32[2]{0}', space=sflag, size = 0x8, scoped, tag = 'scoped memory for tpu_custom_call.1']
    #allocation5 [shape = 'u8[8192]{0}', space=vmem, size = 0x2000, scoped, tag = 'input window, operand 1']
    #allocation6 [shape = 's32[2]{0}', space=sflag, size = 0x8, scoped, tag = 'scoped memory for tpu_custom_call.1']
    #allocation7 [shape = 'u8[8192]{0}', space=vmem, size = 0x2000, scoped, tag = 'output window, operand 0']
    %7 = vsyncpa [#allocation3], 0
    %8 = vsyncpa [#allocation6], 0
    %s9 = scalar_lea.sflag [#allocation6], 1
    %10 = vsyncpa %s9, 0
    %11 = vsyncpa [#allocation4], 0
    %s12 = scalar_lea.sflag [#allocation4], 1
    %13 = vsyncpa %s12, 0
    loop: start=0, step=1, limit=4
    $region2: #{tpu_custom_call.1} parent=1 // loop_pre_header
      _
    $region3: #{tpu_custom_call.1} parent=1 // loop_header
      %s15 = sphi 0, %s19
      %p16 = scmp.ge.s32.totalorder %s15, 4
      %s23 = sphi 0, %s23
      %s25 = sphi 0, %s23
      %s26 = sphi 0, %s25
      %s40 = sphi 0, %s26
      %s46 = sphi 0, %s48
      %s49 = sphi 0, %s46
      %s50 = sphi 0, %s49
      %s66 = sphi 0, %s50
      %s72 = sphi 0, %s74
      %s75 = sphi 0, %s72
      %s76 = sphi 0, %s75
      %s92 = sphi 0, %s76
    $region4: #{tpu_custom_call.1} parent=1 // loop_header_branch
      %18 = sbr.rel (%p16) target = $region8
    $region5: #{tpu_custom_call.1} parent=1 // loop_body
      %s20 = ssub.s32 %s15, 1
      %s21 = ssub.s32 %s15, 2
      %s22 = sadd.s32 %s15, 1
      %s24 = sadd.s32 %s23, 1
      %p27 = scmp.eq.s32.totalorder %s15, 1
      %p28 = scmp.ne.s32.totalorder %s23, %s25
      %p29 = scmp.eq.s32.totalorder %s15, 0
      %p30 = por %p28, %p29
      %p31 = scmp.ne.s32.totalorder %s23, %s25
      %p32 = scmp.eq.s32.totalorder %s20, 1
      %p33 = por %p31, %p32
      %p34 = scmp.ne.s32.totalorder %s25, %s26
      %p35 = scmp.eq.s32.totalorder %s20, 0
      %p36 = por %p34, %p35
      %p37 = scmp.ne.s32.totalorder %s25, %s26
      %p38 = scmp.eq.s32.totalorder %s21, 1
      %p39 = por %p37, %p38
      %p41 = scmp.ne.s32.totalorder %s26, %s40
      %p42 = scmp.eq.s32.totalorder %s21, 0
      %p43 = por %p41, %p42
      %s44 = ssub.s32 %s15, %s22
      %p45 = scmp.eq.s32.totalorder %s44, 0
      %s47 = sadd.s32 %s46, 1
      %s48 = scalar_select %p45, %s46, %s47
      %p51 = pneg %p45
      %p52 = scmp.eq.s32.totalorder %s15, 1
      %p53 = por %p51, %p52
      %p54 = scmp.ne.s32.totalorder %s46, %s49
      %p55 = scmp.eq.s32.totalorder %s15, 0
      %p56 = por %p54, %p55
      %p57 = scmp.ne.s32.totalorder %s46, %s49
      %p58 = scmp.eq.s32.totalorder %s20, 1
      %p59 = por %p57, %p58
      %p60 = scmp.ne.s32.totalorder %s49, %s50
      %p61 = scmp.eq.s32.totalorder %s20, 0
      %p62 = por %p60, %p61
      %p63 = scmp.ne.s32.totalorder %s49, %s50
      %p64 = scmp.eq.s32.totalorder %s21, 1
      %p65 = por %p63, %p64
      %p67 = scmp.ne.s32.totalorder %s50, %s66
      %p68 = scmp.eq.s32.totalorder %s21, 0
      %p69 = por %p67, %p68
      %s70 = ssub.s32 %s15, %s22
      %p71 = scmp.eq.s32.totalorder %s70, 0
      %s73 = sadd.s32 %s72, 1
      %s74 = scalar_select %p71, %s72, %s73
      %p77 = pneg %p71
      %p78 = scmp.eq.s32.totalorder %s15, 1
      %p79 = por %p77, %p78
      %p80 = scmp.ne.s32.totalorder %s72, %s75
      %p81 = scmp.eq.s32.totalorder %s15, 0
      %p82 = por %p80, %p81
      %p83 = scmp.ne.s32.totalorder %s72, %s75
      %p84 = scmp.eq.s32.totalorder %s20, 1
      %p85 = por %p83, %p84
      %p86 = scmp.ne.s32.totalorder %s75, %s76
      %p87 = scmp.eq.s32.totalorder %s20, 0
      %p88 = por %p86, %p87
      %p89 = scmp.ne.s32.totalorder %s75, %s76
      %p90 = scmp.eq.s32.totalorder %s21, 1
      %p91 = por %p89, %p90
      %p93 = scmp.ne.s32.totalorder %s76, %s92
      %p94 = scmp.eq.s32.totalorder %s21, 0
      %p95 = por %p93, %p94
      %p96 = scmp.le.s32.totalorder 1, %s15
      %p97 = scmp.lt.s32.totalorder %s15, 3
      %p98 = pnand %p96, %p97
      %p99 = pneg %p98
      // Predicated region
      $region9: #{tpu_custom_call.1} parent=5 // pred_check
        _
      $region10: #{tpu_custom_call.1} parent=5 // pred_check_branch
        %101 = sbr.rel (%p98) target = $region12
      $region11: #{tpu_custom_call.1} parent=5 // pred_region
        %s102 = ssub.s32 %s15, 1
        // Predicated region
        $region13: #{tpu_custom_call.1} parent=11 // pred_check
          %p103 = pneg %p36
        $region14: #{tpu_custom_call.1} parent=11 // pred_check_branch
          %105 = sbr.rel (%p103) target = $region16
        $region15: #{tpu_custom_call.1} parent=11 // pred_region
          %s107 = ssub.s32 2048, 2048
          %108 = vsyncadd [#allocation3], %s107
          %s109 = sshll.u32 [#allocation2], 4
          %s110 = int_to_ptr.vmem [resolvable:$true] %s109
          %115 = dma.hbm_to_vmem [thread:$0]  %s0, 2048, %s110, [#allocation3], 128, 128, 8
        $region16: #{tpu_custom_call.1} parent=11 // pred_fallthru
          _
      $region12: #{tpu_custom_call.1} parent=5 // pred_fallthru
        _
      %p116 = scmp.lt.s32.totalorder %s15, 2
      // Predicated region
      $region17: #{tpu_custom_call.1} parent=5 // pred_check
        %p117 = pneg %p116
      $region18: #{tpu_custom_call.1} parent=5 // pred_check_branch
        %119 = sbr.rel (%p117) target = $region20
      $region19: #{tpu_custom_call.1} parent=5 // pred_region
        // Predicated region
        $region21: #{tpu_custom_call.1} parent=19 // pred_check
          %p120 = pneg %p56
        $region22: #{tpu_custom_call.1} parent=19 // pred_check_branch
          %122 = sbr.rel (%p120) target = $region24
        $region23: #{tpu_custom_call.1} parent=19 // pred_region
          %s123 = sand.u32 %s46, 1
          %s124 = scalar_lea.sflag [#allocation6], %s123
          %s125 = sand.u32 %s46, 1
          %s126 = smul.addr %s125, 8
          %s127 = scalar_lea.vmem [#allocation5], %s126
          %s129 = ssub.s32 128, 128
          %130 = vsyncadd %s124, %s129
          %s131 = smul.addr %s15, 128
          %s132 = scalar_lea.hbm %s1, %s131
          %s134 = sshll.u32 %s127, 4
          %s135 = int_to_ptr.vmem [resolvable:$true] %s134
          %137 = dma.hbm_to_vmem [thread:$0]  %s132, 128, %s135, %s124
        $region24: #{tpu_custom_call.1} parent=19 // pred_fallthru
          _
      $region20: #{tpu_custom_call.1} parent=5 // pred_fallthru
        _
      %p138 = scmp.le.s32.totalorder 1, %s15
      %p139 = scmp.lt.s32.totalorder %s15, 3
      %p140 = pnand %p138, %p139
      %p141 = pneg %p140
      // Predicated region
      $region25: #{tpu_custom_call.1} parent=5 // pred_check
        _
      $region26: #{tpu_custom_call.1} parent=5 // pred_check_branch
        %143 = sbr.rel (%p140) target = $region28
      $region27: #{tpu_custom_call.1} parent=5 // pred_region
        %s144 = ssub.s32 %s15, 1
        // Predicated region
        $region29: #{tpu_custom_call.1} parent=27 // pred_check
          %p145 = pneg %p36
        $region30: #{tpu_custom_call.1} parent=27 // pred_check_branch
          %147 = sbr.rel (%p145) target = $region32
        $region31: #{tpu_custom_call.1} parent=27 // pred_region
          %148 = dma.done [#allocation3], 2048
        $region32: #{tpu_custom_call.1} parent=27 // pred_fallthru
          _
        %s149 = sand.u32 %s49, 1
        %s150 = scalar_lea.sflag [#allocation6], %s149
        %s151 = sand.u32 %s49, 1
        %s152 = smul.addr %s151, 8
        %s153 = scalar_lea.vmem [#allocation5], %s152
        // Predicated region
        $region33: #{tpu_custom_call.1} parent=27 // pred_check
          %p154 = pneg %p62
        $region34: #{tpu_custom_call.1} parent=27 // pred_check_branch
          %156 = sbr.rel (%p154) target = $region36
        $region35: #{tpu_custom_call.1} parent=27 // pred_region
          %157 = dma.done %s150, 128
        $region36: #{tpu_custom_call.1} parent=27 // pred_fallthru
          _
        %p158 = pneg %p36
        %p159 = pneg %p33
        %s160 = sand.u32 %s49, 1
        %s161 = scalar_lea.sflag [#allocation6], %s160
        %s162 = sand.u32 %s49, 1
        %s163 = smul.addr %s162, 8
        %s164 = scalar_lea.vmem [#allocation5], %s163
        %p165 = pneg %p62
        %p166 = pneg %p59
        %p167 = pneg %p88
        %p168 = pneg %p85
        %s169 = sand.u32 %s75, 1
        %s170 = scalar_lea.sflag [#allocation4], %s169
        %s171 = sand.u32 %s75, 1
        %s172 = smul.addr %s171, 8
        %s173 = scalar_lea.vmem [#allocation7], %s172
        %v174 = vld [vmem:[%s153] sm:$0xff]
        %v175 = vld [vmem:[#allocation2] sm:$0xff]
        %v176 = vld [vmem:[#allocation2 + $0x8] sm:$0xff]
        %v177 = vld [vmem:[#allocation2 + $0x10] sm:$0xff]
        %v178 = vld [vmem:[#allocation2 + $0x18] sm:$0xff]
        %v179 = vld [vmem:[#allocation2 + $0x20] sm:$0xff]
        %v180 = vld [vmem:[#allocation2 + $0x28] sm:$0xff]
        %v181 = vld [vmem:[#allocation2 + $0x30] sm:$0xff]
        %v182 = vld [vmem:[#allocation2 + $0x38] sm:$0xff]
        %v183 = vld [vmem:[#allocation2 + $0x40] sm:$0xff]
        %v184 = vld [vmem:[#allocation2 + $0x48] sm:$0xff]
        %v185 = vld [vmem:[#allocation2 + $0x50] sm:$0xff]
        %v186 = vld [vmem:[#allocation2 + $0x58] sm:$0xff]
        %v187 = vld [vmem:[#allocation2 + $0x60] sm:$0xff]
        %v188 = vld [vmem:[#allocation2 + $0x68] sm:$0xff]
        %v189 = vld [vmem:[#allocation2 + $0x70] sm:$0xff]
        %v190 = vld [vmem:[#allocation2 + $0x78] sm:$0xff]
        %191 = vmatprep.subr.mxu0 0.0
        %192 = vmatpush1.msra.mxu0 %v190
        %193 = vmatprep.subr.mxu0 0.0
        %194 = vmatpush1.msra.mxu0 %v189
        %195 = vmatprep.subr.mxu0 0.0
        %196 = vmatpush1.msra.mxu0 %v188
        %197 = vmatprep.subr.mxu0 0.0
        %198 = vmatpush1.msra.mxu0 %v187
        %199 = vmatprep.subr.mxu0 0.0
        %200 = vmatpush1.msra.mxu0 %v186
        %201 = vmatprep.subr.mxu0 0.0
        %202 = vmatpush1.msra.mxu0 %v185
        %203 = vmatprep.subr.mxu0 0.0
        %204 = vmatpush1.msra.mxu0 %v184
        %205 = vmatprep.subr.mxu0 0.0
        %206 = vmatpush1.msra.mxu0 %v183
        %207 = vmatprep.subr.mxu0 0.0
        %208 = vmatpush1.msra.mxu0 %v182
        %209 = vmatprep.subr.mxu0 0.0
        %210 = vmatpush1.msra.mxu0 %v181
        %211 = vmatprep.subr.mxu0 0.0
        %212 = vmatpush1.msra.mxu0 %v180
        %213 = vmatprep.subr.mxu0 0.0
        %214 = vmatpush1.msra.mxu0 %v179
        %215 = vmatprep.subr.mxu0 0.0
        %216 = vmatpush1.msra.mxu0 %v178
        %217 = vmatprep.subr.mxu0 0.0
        %218 = vmatpush1.msra.mxu0 %v177
        %219 = vmatprep.subr.mxu0 0.0
        %220 = vmatpush1.msra.mxu0 %v176
        %221 = vmatprep.subr.mxu0 0.0
        %222 = vmatpush1.msra.mxu0 %v175
        %223 = vmatprep.subr.mxu0 0.0
        %224 = vmatpush2.msra.mxu0 0.0
        %225 = vmatprep.subr.mxu0 0.0
        %226 = vmatpush2.msra.mxu0 0.0
        %227 = vmatprep.subr.mxu0 0.0
        %228 = vmatpush2.msra.mxu0 0.0
        %229 = vmatprep.subr.mxu0 0.0
        %230 = vmatpush2.msra.mxu0 0.0
        %231 = vmatprep.subr.mxu0 0.0
        %232 = vmatpush2.msra.mxu0 0.0
        %233 = vmatprep.subr.mxu0 0.0
        %234 = vmatpush2.msra.mxu0 0.0
        %235 = vmatprep.subr.mxu0 0.0
        %236 = vmatpush2.msra.mxu0 0.0
        %237 = vmatprep.subr.mxu0 0.0
        %238 = vmatpush2.msra.mxu0 0.0
        %239 = vmatprep.subr.mxu0 0.0
        %240 = vmatpush2.msra.mxu0 0.0
        %241 = vmatprep.subr.mxu0 0.0
        %242 = vmatpush2.msra.mxu0 0.0
        %243 = vmatprep.subr.mxu0 0.0
        %244 = vmatpush2.msra.mxu0 0.0
        %245 = vmatprep.subr.mxu0 0.0
        %246 = vmatpush2.msra.mxu0 0.0
        %247 = vmatprep.subr.mxu0 0.0
        %248 = vmatpush2.msra.mxu0 0.0
        %249 = vmatprep.subr.mxu0 0.0
        %250 = vmatpush2.msra.mxu0 0.0
        %251 = vmatprep.subr.mxu0 0.0
        %252 = vmatpush2.msra.mxu0 0.0
        %253 = vmatprep.subr.mxu0 0.0
        %254 = vmatpush2.msra.mxu0 0.0
        %255 = vmatprep.mubr.f32.mxu0 0.0
        %256 = vmatmul.mubr.f32.gmra.mxu0 %v174
        %v257 = vpop.f32.mrf.mxu0
        %v258 = vadd.f32 0.0, %v257
        %v259 = vpop.f32.mrf.mxu0
        %260 = vdwg.mxu0
        %v261 = vmul.f32 %v258, %v174
        %262 = vst [vmem:[%s173] sm:$0xff] %v261
        %s263 = sand.u32 %s75, 1
        %s264 = scalar_lea.sflag [#allocation4], %s263
        %s265 = sand.u32 %s75, 1
        %s266 = smul.addr %s265, 8
        %s267 = scalar_lea.vmem [#allocation7], %s266
        // Predicated region
        $region37: #{tpu_custom_call.1} parent=27 // pred_check
          %p268 = pneg %p85
        $region38: #{tpu_custom_call.1} parent=27 // pred_check_branch
          %270 = sbr.rel (%p268) target = $region40
        $region39: #{tpu_custom_call.1} parent=27 // pred_region
          %s272 = ssub.s32 128, 128
          %273 = vsyncadd %s264, %s272
          %s274 = smul.addr %s20, 128
          %s275 = scalar_lea.hbm %s2, %s274
          %s277 = sshll.u32 %s267, 4
          %s278 = int_to_ptr.vmem [resolvable:$true] %s277
          %280 = dma.vmem_to_hbm [thread:$0]  %s278, 128, %s275, %s264
        $region40: #{tpu_custom_call.1} parent=27 // pred_fallthru
          _
      $region28: #{tpu_custom_call.1} parent=5 // pred_fallthru
        _
      %p281 = scmp.le.s32.totalorder 2, %s15
      // Predicated region
      $region41: #{tpu_custom_call.1} parent=5 // pred_check
        %p282 = pneg %p281
      $region42: #{tpu_custom_call.1} parent=5 // pred_check_branch
        %284 = sbr.rel (%p282) target = $region44
      $region43: #{tpu_custom_call.1} parent=5 // pred_region
        %s285 = ssub.s32 %s15, 2
        // Predicated region
        $region45: #{tpu_custom_call.1} parent=43 // pred_check
          %p286 = pneg %p91
        $region46: #{tpu_custom_call.1} parent=43 // pred_check_branch
          %288 = sbr.rel (%p286) target = $region48
        $region47: #{tpu_custom_call.1} parent=43 // pred_region
          %s289 = sand.u32 %s76, 1
          %s290 = scalar_lea.sflag [#allocation4], %s289
          %s291 = sand.u32 %s76, 1
          %s292 = smul.addr %s291, 8
          %s293 = scalar_lea.vmem [#allocation7], %s292
          %294 = dma.done %s290, 128
        $region48: #{tpu_custom_call.1} parent=43 // pred_fallthru
          _
      $region44: #{tpu_custom_call.1} parent=5 // pred_fallthru
        _
    $region6: #{tpu_custom_call.1} parent=1 // loop_footer
      %s19 = sadd.s32 1, %s15
    $region7: #{tpu_custom_call.1} parent=1 // loop_footer_branch
      %14 = sbr.rel target = $region3
    $region8: #{tpu_custom_call.1} parent=1 // loop_exit
      _
    %295 = vsyncpa [#allocation3], 1
    %s296 = scalar_lea.sflag [#allocation3], 1
    %297 = vsyncpa %s296, 1
    %298 = vsyncpa [#allocation6], 1
    %s299 = scalar_lea.sflag [#allocation6], 1
    %300 = vsyncpa %s299, 1
    %301 = vsyncpa [#allocation4], 1
    %s302 = scalar_lea.sflag [#allocation4], 1
    %303 = vsyncpa %s302, 1

</llo_original>
